<compile_context>
chip_gen: v5e
topology: v5e:2x2
jax: 0.10.0
libtpu: 0.0.40
codegen_flags: <defaults>
</compile_context>

<pallas_src>
from functools import partial

import jax
import jax.numpy as jnp
from jax.experimental import pallas as pl
from jax.experimental.pallas import tpu as pltpu

_MIB = 1024 * 1024


def _vmem_budgets():
    """Returns (vmem_limit_bytes for CompilerParams, pipelined-block budget)."""
    try:
        cap = int(pltpu.get_tpu_info().vmem_capacity_bytes)
    except Exception:
        cap = 64 * _MIB                                 # conservative (v7x-sized) fallback
    vmem_limit = min((cap * 3) // 4, 96 * _MIB)         # 96 MiB on v5e/v6e, 48 MiB on v7x
    block_budget = min(vmem_limit // 2, 40 * _MIB)      # ~40 MiB v5e/v6e, ~24 MiB v7x
    return vmem_limit, block_budget


def _sigmoid(x):
    # exp/div only (EUP-friendly, avoids relying on lax.logistic lowering).
    return 1.0 / (1.0 + jnp.exp(-x))


# ---------------------------------------------------------------------------
# Fused single-pass kernel: one batch element per grid step, whole slab in
# VMEM.  Pooling, both SE FCs, sigmoid, rescale, (optional) 1x1 align conv and
# the final add — activations are read from HBM exactly once.
# ---------------------------------------------------------------------------
def _fused_kernel(use_align, small_cd, inv_hw,
                  rgb_ref, dep_ref,
                  w1r_ref, b1r_ref, w2r_ref, b2r_ref,
                  w1d_ref, b1d_ref, w2d_ref, b2d_ref,
                  *rest):
    if use_align:
        wal_ref, out_ref = rest
    else:
        (out_ref,) = rest

    rgb32 = rgb_ref[...].astype(jnp.float32)          # (Cr, HW)
    dep32 = dep_ref[...].astype(jnp.float32)          # (Cd, HW)

    def se_gate(x32, w1, b1, w2, b2):
        pooled = jnp.sum(x32, axis=-1, keepdims=True) * inv_hw            # (C, 1)
        h = jnp.dot(w1, pooled, preferred_element_type=jnp.float32) + b1  # (C/r, 1)
        h = jnp.maximum(h, 0.0)
        s = jnp.dot(w2, h, preferred_element_type=jnp.float32) + b2       # (C, 1)
        return _sigmoid(s)

    s_rgb = se_gate(rgb32, w1r_ref[...], b1r_ref[...], w2r_ref[...], b2r_ref[...])
    s_dep = se_gate(dep32, w1d_ref[...], b1d_ref[...], w2d_ref[...], b2d_ref[...])

    out = rgb32 * s_rgb                                                   # (Cr, HW)

    if use_align:
        if small_cd:
            # Tiny contraction: unrolled VPU multiply-accumulate, depth gate
            # folded into the weight column (no padded MXU issue).
            cd = dep_ref.shape[0]
            for c in range(cd):
                w_col = wal_ref[:, c:c + 1].astype(jnp.float32) * s_dep[c:c + 1, :]
                out = out + w_col * dep32[c:c + 1, :]
        else:
            op_dt = jnp.bfloat16 if dep_ref.dtype == jnp.bfloat16 else jnp.float32
            dep_scaled = (dep32 * s_dep).astype(op_dt)
            out = out + jnp.dot(wal_ref[...].astype(op_dt), dep_scaled,
                                preferred_element_type=jnp.float32)
    else:
        out = out + dep32 * s_dep

    out_ref[...] = out.astype(out_ref.dtype)


# ---------------------------------------------------------------------------
# Two-pass streaming kernel: per-channel rescale, optional folded 1x1 align
# conv, add.  aux is either walign_b (Cr, Cd) with the depth gate pre-folded,
# or s_dep (Cd, 1) when no align conv is needed.
# ---------------------------------------------------------------------------
def _stream_kernel(use_align, small_cd, rgb_ref, dep_ref, srgb_ref, aux_ref, out_ref):
    out = rgb_ref[...].astype(jnp.float32) * srgb_ref[...]
    if use_align:
        if small_cd:
            dep32 = dep_ref[...].astype(jnp.float32)
            cd = dep_ref.shape[0]
            for c in range(cd):
                out = out + aux_ref[:, c:c + 1].astype(jnp.float32) * dep32[c:c + 1, :]
        else:
            # native-dtype operands (bf16 x bf16 when inputs are bf16), f32 acc.
            out = out + jnp.dot(aux_ref[...], dep_ref[...],
                                preferred_element_type=jnp.float32)
    else:
        out = out + dep_ref[...].astype(jnp.float32) * aux_ref[...]
    out_ref[...] = out.astype(out_ref.dtype)


def _se_scale(x, w1, b1, w2, b2):
    """SE 'squeeze' path in plain JAX (two-pass path only), f32 accumulation.

    x: (N, C, H, W).  Returns the per-(batch, channel) sigmoid gate (N, C, 1) f32.
    """
    pooled = jnp.mean(x.astype(jnp.float32), axis=(2, 3))                 # (N, C)
    h = pooled @ w1.astype(jnp.float32).T + b1.astype(jnp.float32).reshape(1, -1)
    h = jnp.maximum(h, 0.0)
    s = h @ w2.astype(jnp.float32).T + b2.astype(jnp.float32).reshape(1, -1)
    return jax.nn.sigmoid(s)[..., None]                                   # (N, C, 1)


def squeeze_excite_fusion_add(rgb, depth, params, *, mode="auto", tile_hw=None,
                              vmem_limit_bytes=None, block_budget_bytes=None):
    """rgb: (N, C_rgb, H, W), depth: (N, C_dep, H, W) — NCHW like PyTorch."""
    assert mode in ("auto", "fused", "stream")
    N, Cr, H, W = rgb.shape
    Nd, Cd, Hd, Wd = depth.shape
    assert N == Nd and (H, W) == (Hd, Wd)
    HW = H * W
    use_align = Cr != Cd
    small_cd = use_align and Cd <= 8
    itemsize = jnp.dtype(rgb.dtype).itemsize

    auto_limit, auto_budget = _vmem_budgets()
    vmem_limit = int(vmem_limit_bytes or auto_limit)
    budget = int(block_budget_bytes or auto_budget)

    rgb_f = rgb.reshape(N, Cr, HW)          # collapse trailing dims: no copy
    dep_f = depth.reshape(N, Cd, HW)

    # --- dispatch: fused single-pass if the per-batch slab fits VMEM ---------
    w_elems = sum(int(v.size) for v in params.values())
    fused_bytes = (2 * (2 * Cr + Cd) * HW * itemsize        # double-buffered in/out blocks
                   + 2 * (Cr + Cd) * HW * 4                 # f32 intermediates
                   + 2 * w_elems * 4)
    if mode == "fused":
        use_fused = True
    elif mode == "stream":
        use_fused = False
    else:
        # Prefer one HBM read of the activations; for N == 1 only when the
        # problem is tiny (keep >=2 grid steps for v7x's two TensorCores).
        use_fused = fused_bytes <= budget and (N >= 2 or HW <= 1024)

    if use_fused:
        w_list = [params["w1_rgb"], params["b1_rgb"], params["w2_rgb"], params["b2_rgb"],
                  params["w1_depth"], params["b1_depth"], params["w2_depth"], params["b2_depth"]]
        args = [rgb_f, dep_f] + [w.astype(jnp.float32) for w in w_list]
        in_specs = [pl.BlockSpec((None, Cr, HW), lambda b: (b, 0, 0)),
                    pl.BlockSpec((None, Cd, HW), lambda b: (b, 0, 0))]
        in_specs += [pl.BlockSpec(w.shape, lambda b: (0, 0)) for w in w_list]
        if use_align:
            args.append(params["w_align"].astype(jnp.float32))
            in_specs.append(pl.BlockSpec(params["w_align"].shape, lambda b: (0, 0)))

        out = pl.pallas_call(
            partial(_fused_kernel, use_align, small_cd, 1.0 / HW),
            out_shape=jax.ShapeDtypeStruct((N, Cr, HW), rgb.dtype),
            grid_spec=pltpu.PrefetchScalarGridSpec(
                num_scalar_prefetch=0,
                grid=(N,),
                in_specs=in_specs,
                out_specs=pl.BlockSpec((None, Cr, HW), lambda b: (b, 0, 0))),
            compiler_params=pltpu.CompilerParams(
                dimension_semantics=("parallel",),
                vmem_limit_bytes=vmem_limit),
        )(*args)
        return out.reshape(N, Cr, H, W)

    # --- two-pass streaming path ---------------------------------------------
    s_rgb = _se_scale(rgb, params["w1_rgb"], params["b1_rgb"],
                      params["w2_rgb"], params["b2_rgb"])                 # (N, Cr, 1) f32
    s_dep = _se_scale(depth, params["w1_depth"], params["b1_depth"],
                      params["w2_depth"], params["b2_depth"])             # (N, Cd, 1) f32

    # Per-lane VMEM: double-buffered native-dtype in/out blocks + f32 temporaries.
    bytes_per_lane = 2 * (2 * Cr + Cd) * itemsize + (2 * Cr + Cd) * 4
    t_max = max(128, min(8192, (budget // bytes_per_lane) // 128 * 128))
    if tile_hw is None:
        if t_max >= HW:
            tile_hw = HW                                  # one exact full-width tile
        else:
            tile_hw = t_max
            if HW % tile_hw:                              # prefer a divisor: no ragged tail
                for cand in range(t_max, max(0, t_max // 2 - 1), -128):
                    if HW % cand == 0:
                        tile_hw = cand
                        break
    else:
        tile_hw = max(128, (int(tile_hw) // 128) * 128)
        if tile_hw >= HW:
            tile_hw = HW
    num_tiles = pl.cdiv(HW, tile_hw)   # ragged last tile handled by Pallas masking

    args = [rgb_f, dep_f, s_rgb]
    in_specs = [pl.BlockSpec((None, Cr, tile_hw), lambda b, s: (b, 0, s)),
                pl.BlockSpec((None, Cd, tile_hw), lambda b, s: (b, 0, s)),
                pl.BlockSpec((None, Cr, 1), lambda b, s: (b, 0, 0))]
    if use_align:
        # Fold the depth SE gate into the 1x1 align weight (tiny, plain JAX),
        # kept in the activation dtype so bf16 inputs hit the MXU at full rate.
        walign_b = (params["w_align"][None, :, :].astype(jnp.float32)
                    * jnp.transpose(s_dep, (0, 2, 1))).astype(depth.dtype)
        args.append(walign_b)
        in_specs.append(pl.BlockSpec((None, Cr, Cd), lambda b, s: (b, 0, 0)))
    else:
        args.append(s_dep)
        in_specs.append(pl.BlockSpec((None, Cd, 1), lambda b, s: (b, 0, 0)))

    out = pl.pallas_call(
        partial(_stream_kernel, use_align, small_cd),
        out_shape=jax.ShapeDtypeStruct((N, Cr, HW), rgb.dtype),
        grid_spec=pltpu.PrefetchScalarGridSpec(
            num_scalar_prefetch=0,
            grid=(N, num_tiles),
            in_specs=in_specs,
            out_specs=pl.BlockSpec((None, Cr, tile_hw), lambda b, s: (b, 0, s))),
        compiler_params=pltpu.CompilerParams(
            dimension_semantics=("parallel", "parallel"),
            vmem_limit_bytes=vmem_limit),
    )(*args)
    return out.reshape(N, Cr, H, W)


def reference(rgb, depth, params):
    """Pure-JAX reference mirroring the PyTorch forward."""
    def se(x, w1, b1, w2, b2):
        pooled = jnp.mean(x, axis=(2, 3), keepdims=True)                  # (N, C, 1, 1)
        h = jnp.einsum('oc,ncij->noij', w1, pooled) + b1.reshape(1, -1, 1, 1)
        h = jnp.maximum(h, 0.0)
        s = jnp.einsum('oc,ncij->noij', w2, h) + b2.reshape(1, -1, 1, 1)
        return x * jax.nn.sigmoid(s)

    r = se(rgb, params["w1_rgb"], params["b1_rgb"], params["w2_rgb"], params["b2_rgb"])
    d = se(depth, params["w1_depth"], params["b1_depth"], params["w2_depth"], params["b2_depth"])
    if rgb.shape[1] != depth.shape[1]:
        d = jnp.einsum('oc,nchw->nohw', params["w_align"], d)
    return r + d


def _make_params(key, Cr, Cd, r=4, with_align=True):
    ks = jax.random.split(key, 9)
    params = {
        "w1_rgb":   0.2 * jax.random.normal(ks[0], (max(Cr // r, 1), Cr), jnp.float32),
        "b1_rgb":   0.1 * jax.random.normal(ks[1], (max(Cr // r, 1), 1), jnp.float32),
        "w2_rgb":   0.2 * jax.random.normal(ks[2], (Cr, max(Cr // r, 1)), jnp.float32),
        "b2_rgb":   0.1 * jax.random.normal(ks[3], (Cr, 1), jnp.float32),
        "w1_depth": 0.2 * jax.random.normal(ks[4], (max(Cd // r, 1), Cd), jnp.float32),
        "b1_depth": 0.1 * jax.random.normal(ks[5], (max(Cd // r, 1), 1), jnp.float32),
        "w2_depth": 0.2 * jax.random.normal(ks[6], (Cd, max(Cd // r, 1)), jnp.float32),
        "b2_depth": 0.1 * jax.random.normal(ks[7], (Cd, 1), jnp.float32),
    }
    if with_align:
        params["w_align"] = 0.2 * jax.random.normal(ks[8], (Cr, Cd), jnp.float32)
    return params


if __name__ == "__main__":
    key = jax.random.PRNGKey(0)

    def check(name, rgb, depth, params, **kw):
        out = jax.block_until_ready(squeeze_excite_fusion_add(rgb, depth, params, **kw))
        ref = reference(rgb, depth, params)
        assert out.shape == ref.shape, f"{name}: shape {out.shape} vs {ref.shape}"
        err = jnp.max(jnp.abs(out - ref))
        assert jnp.allclose(out, ref, atol=2e-5, rtol=2e-5), f"{name}: max abs err = {err}"

    # Case 1: Cr != Cd -> align-conv path; fused single-pass (auto) + forced stream.
    N, Cr, Cd, H, W = 2, 8, 4, 16, 16
    k1, k2, k3 = jax.random.split(key, 3)
    rgb = jax.random.normal(k1, (N, Cr, H, W), jnp.float32)
    depth = jax.random.normal(k2, (N, Cd, H, W), jnp.float32)
    params = _make_params(k3, Cr, Cd, with_align=True)
    check("align/fused", rgb, depth, params, mode="auto")
    check("align/stream", rgb, depth, params, mode="stream")

    # Case 2: Cr == Cd (no align conv) with ragged H*W = 120 (< 128 lanes).
    N2, C2, H2, W2 = 2, 8, 10, 12
    k4, k5, k6 = jax.random.split(k3, 3)
    rgb2 = jax.random.normal(k4, (N2, C2, H2, W2), jnp.float32)
    depth2 = jax.random.normal(k5, (N2, C2, H2, W2), jnp.float32)
    params2 = _make_params(k6, C2, C2, with_align=False)
    check("noalign/fused", rgb2, depth2, params2, mode="auto")
    check("noalign/stream", rgb2, depth2, params2, mode="stream")

    # Case 3: streaming path with a ragged LAST spatial tile (HW=400, tile=128
    # -> 4 tiles, masked tail; no input pad / output slice) + small-Cd VPU path.
    N3, Cr3, Cd3, H3, W3 = 2, 8, 4, 20, 20
    k7, k8, k9 = jax.random.split(k6, 3)
    rgb3 = jax.random.normal(k7, (N3, Cr3, H3, W3), jnp.float32)
    depth3 = jax.random.normal(k8, (N3, Cd3, H3, W3), jnp.float32)
    params3 = _make_params(k9, Cr3, Cd3, with_align=True)
    check("align/stream/ragged", rgb3, depth3, params3, mode="stream", tile_hw=128)

    print("KERNEL_OK")
</pallas_src>

<mosaic_0001>
module attributes {stable_mosaic.version = 11 : i64} {
  func.func @_fused_kernel(%arg0: i32, %arg1: memref<1x8x256xf32, #tpu.memory_space<vmem>>, %arg2: memref<1x4x256xf32, #tpu.memory_space<vmem>>, %arg3: memref<2x8xf32, #tpu.memory_space<vmem>>, %arg4: memref<2x1xf32, #tpu.memory_space<vmem>>, %arg5: memref<8x2xf32, #tpu.memory_space<vmem>>, %arg6: memref<8x1xf32, #tpu.memory_space<vmem>>, %arg7: memref<1x4xf32, #tpu.memory_space<vmem>>, %arg8: memref<1x1xf32, #tpu.memory_space<vmem>>, %arg9: memref<4x1xf32, #tpu.memory_space<vmem>>, %arg10: memref<4x1xf32, #tpu.memory_space<vmem>>, %arg11: memref<8x4xf32, #tpu.memory_space<vmem>>, %arg12: memref<1x8x256xf32, #tpu.memory_space<vmem>>) attributes {dimension_semantics = [#tpu.dimension_semantics<parallel>], iteration_bounds = array<i64: 2>, scalar_prefetch = 0 : i64, scratch_operands = 0 : i64, tpu.core_type = #tpu.core_type<tc>, window_params = [{transform_indices = @transform_0, window_bounds = array<i64: 1, 8, 256>}, {transform_indices = @transform_1, window_bounds = array<i64: 1, 4, 256>}, {pipeline_mode = #tpu.pipeline_mode<synchronous>, transform_indices = @transform_2, window_bounds = array<i64: 2, 8>}, {pipeline_mode = #tpu.pipeline_mode<synchronous>, transform_indices = @transform_3, window_bounds = array<i64: 2, 1>}, {pipeline_mode = #tpu.pipeline_mode<synchronous>, transform_indices = @transform_4, window_bounds = array<i64: 8, 2>}, {pipeline_mode = #tpu.pipeline_mode<synchronous>, transform_indices = @transform_5, window_bounds = array<i64: 8, 1>}, {pipeline_mode = #tpu.pipeline_mode<synchronous>, transform_indices = @transform_6, window_bounds = array<i64: 1, 4>}, {pipeline_mode = #tpu.pipeline_mode<synchronous>, transform_indices = @transform_7, window_bounds = array<i64: 1, 1>}, {pipeline_mode = #tpu.pipeline_mode<synchronous>, transform_indices = @transform_8, window_bounds = array<i64: 4, 1>}, {pipeline_mode = #tpu.pipeline_mode<synchronous>, transform_indices = @transform_9, window_bounds = array<i64: 4, 1>}, {pipeline_mode = #tpu.pipeline_mode<synchronous>, transform_indices = @transform_10, window_bounds = array<i64: 8, 4>}, {transform_indices = @transform_11, window_bounds = array<i64: 1, 8, 256>}]} {
    %c0 = arith.constant 0 : index
    %c0_0 = arith.constant 0 : index
    %c0_1 = arith.constant 0 : index
    %0 = vector.load %arg1[%c0, %c0_0, %c0_1] : memref<1x8x256xf32, #tpu.memory_space<vmem>>, vector<1x8x256xf32>
    %1 = vector.shape_cast %0 : vector<1x8x256xf32> to vector<8x256xf32>
    %c0_2 = arith.constant 0 : index
    %c0_3 = arith.constant 0 : index
    %c0_4 = arith.constant 0 : index
    %2 = vector.load %arg2[%c0_2, %c0_3, %c0_4] : memref<1x4x256xf32, #tpu.memory_space<vmem>>, vector<1x4x256xf32>
    %3 = vector.shape_cast %2 : vector<1x4x256xf32> to vector<4x256xf32>
    %c0_5 = arith.constant 0 : index
    %c0_6 = arith.constant 0 : index
    %4 = vector.load %arg3[%c0_5, %c0_6] : memref<2x8xf32, #tpu.memory_space<vmem>>, vector<2x8xf32>
    %c0_7 = arith.constant 0 : index
    %c0_8 = arith.constant 0 : index
    %5 = vector.load %arg4[%c0_7, %c0_8] : memref<2x1xf32, #tpu.memory_space<vmem>>, vector<2x1xf32>
    %c0_9 = arith.constant 0 : index
    %c0_10 = arith.constant 0 : index
    %6 = vector.load %arg5[%c0_9, %c0_10] : memref<8x2xf32, #tpu.memory_space<vmem>>, vector<8x2xf32>
    %c0_11 = arith.constant 0 : index
    %c0_12 = arith.constant 0 : index
    %7 = vector.load %arg6[%c0_11, %c0_12] : memref<8x1xf32, #tpu.memory_space<vmem>>, vector<8x1xf32>
    %cst = arith.constant dense<0.000000e+00> : vector<8xf32>
    %8 = vector.multi_reduction <add>, %1, %cst [1] : vector<8x256xf32> to vector<8xf32>
    %9 = vector.shape_cast %8 : vector<8xf32> to vector<8x1xf32>
    %cst_13 = arith.constant 3.906250e-03 : f32
    %10 = vector.broadcast %cst_13 : f32 to vector<8x1xf32>
    %11 = arith.mulf %9, %10 : vector<8x1xf32>
    %cst_14 = arith.constant dense<0.000000e+00> : vector<2x1xf32>
    %12 = tpu.matmul %4, %11, %cst_14 {dimension_numbers = #tpu.dot_dimension_numbers<[1], [0], [0], [1], [0, 0, 1, 1], [], []>} : vector<2x8xf32>, vector<8x1xf32>, vector<2x1xf32> -> vector<2x1xf32>
    %13 = arith.addf %12, %5 : vector<2x1xf32>
    %cst_15 = arith.constant 0.000000e+00 : f32
    %14 = vector.broadcast %cst_15 : f32 to vector<2x1xf32>
    %15 = arith.maximumf %13, %14 : vector<2x1xf32>
    %cst_16 = arith.constant dense<0.000000e+00> : vector<8x1xf32>
    %16 = tpu.matmul %6, %15, %cst_16 {dimension_numbers = #tpu.dot_dimension_numbers<[1], [0], [0], [1], [0, 0, 1, 1], [], []>} : vector<8x2xf32>, vector<2x1xf32>, vector<8x1xf32> -> vector<8x1xf32>
    %17 = arith.addf %16, %7 : vector<8x1xf32>
    %cst_17 = arith.constant 0.000000e+00 : f32
    %18 = vector.broadcast %cst_17 : f32 to vector<8x1xf32>
    %19 = arith.subf %18, %17 : vector<8x1xf32>
    %20 = math.exp %19 : vector<8x1xf32>
    %cst_18 = arith.constant 1.000000e+00 : f32
    %21 = vector.broadcast %cst_18 : f32 to vector<8x1xf32>
    %22 = arith.addf %21, %20 : vector<8x1xf32>
    %cst_19 = arith.constant 1.000000e+00 : f32
    %23 = vector.broadcast %cst_19 : f32 to vector<8x1xf32>
    %24 = arith.divf %23, %22 : vector<8x1xf32>
    %c0_20 = arith.constant 0 : index
    %c0_21 = arith.constant 0 : index
    %25 = vector.load %arg7[%c0_20, %c0_21] : memref<1x4xf32, #tpu.memory_space<vmem>>, vector<1x4xf32>
    %c0_22 = arith.constant 0 : index
    %c0_23 = arith.constant 0 : index
    %26 = vector.load %arg8[%c0_22, %c0_23] : memref<1x1xf32, #tpu.memory_space<vmem>>, vector<1x1xf32>
    %c0_24 = arith.constant 0 : index
    %c0_25 = arith.constant 0 : index
    %27 = vector.load %arg9[%c0_24, %c0_25] : memref<4x1xf32, #tpu.memory_space<vmem>>, vector<4x1xf32>
    %c0_26 = arith.constant 0 : index
    %c0_27 = arith.constant 0 : index
    %28 = vector.load %arg10[%c0_26, %c0_27] : memref<4x1xf32, #tpu.memory_space<vmem>>, vector<4x1xf32>
    %cst_28 = arith.constant dense<0.000000e+00> : vector<4xf32>
    %29 = vector.multi_reduction <add>, %3, %cst_28 [1] : vector<4x256xf32> to vector<4xf32>
    %30 = vector.shape_cast %29 : vector<4xf32> to vector<4x1xf32>
    %cst_29 = arith.constant 3.906250e-03 : f32
    %31 = vector.broadcast %cst_29 : f32 to vector<4x1xf32>
    %32 = arith.mulf %30, %31 : vector<4x1xf32>
    %cst_30 = arith.constant dense<0.000000e+00> : vector<1x1xf32>
    %33 = tpu.matmul %25, %32, %cst_30 {dimension_numbers = #tpu.dot_dimension_numbers<[1], [0], [0], [1], [0, 0, 1, 1], [], []>} : vector<1x4xf32>, vector<4x1xf32>, vector<1x1xf32> -> vector<1x1xf32>
    %34 = arith.addf %33, %26 : vector<1x1xf32>
    %cst_31 = arith.constant 0.000000e+00 : f32
    %35 = vector.broadcast %cst_31 : f32 to vector<1x1xf32>
    %36 = arith.maximumf %34, %35 : vector<1x1xf32>
    %cst_32 = arith.constant dense<0.000000e+00> : vector<4x1xf32>
    %37 = tpu.matmul %27, %36, %cst_32 {dimension_numbers = #tpu.dot_dimension_numbers<[1], [0], [0], [1], [0, 0, 1, 1], [], []>} : vector<4x1xf32>, vector<1x1xf32>, vector<4x1xf32> -> vector<4x1xf32>
    %38 = arith.addf %37, %28 : vector<4x1xf32>
    %cst_33 = arith.constant 0.000000e+00 : f32
    %39 = vector.broadcast %cst_33 : f32 to vector<4x1xf32>
    %40 = arith.subf %39, %38 : vector<4x1xf32>
    %41 = math.exp %40 : vector<4x1xf32>
    %cst_34 = arith.constant 1.000000e+00 : f32
    %42 = vector.broadcast %cst_34 : f32 to vector<4x1xf32>
    %43 = arith.addf %42, %41 : vector<4x1xf32>
    %cst_35 = arith.constant 1.000000e+00 : f32
    %44 = vector.broadcast %cst_35 : f32 to vector<4x1xf32>
    %45 = arith.divf %44, %43 : vector<4x1xf32>
    %46 = vector.broadcast %24 : vector<8x1xf32> to vector<8x256xf32>
    %47 = arith.mulf %1, %46 : vector<8x256xf32>
    %c0_36 = arith.constant 0 : index
    %c0_37 = arith.constant 0 : index
    %48 = vector.load %arg11[%c0_36, %c0_37] : memref<8x4xf32, #tpu.memory_space<vmem>>, vector<8x1xf32>
    %49 = vector.extract_strided_slice %45 {offsets = [0, 0], sizes = [1, 1], strides = [1, 1]} : vector<4x1xf32> to vector<1x1xf32>
    %50 = vector.broadcast %49 : vector<1x1xf32> to vector<8x1xf32>
    %51 = arith.mulf %48, %50 : vector<8x1xf32>
    %52 = vector.extract_strided_slice %3 {offsets = [0, 0], sizes = [1, 256], strides = [1, 1]} : vector<4x256xf32> to vector<1x256xf32>
    %53 = vector.broadcast %51 : vector<8x1xf32> to vector<8x256xf32>
    %54 = vector.broadcast %52 : vector<1x256xf32> to vector<8x256xf32>
    %55 = arith.mulf %53, %54 : vector<8x256xf32>
    %56 = arith.addf %47, %55 : vector<8x256xf32>
    %c0_38 = arith.constant 0 : index
    %c1 = arith.constant 1 : index
    %57 = vector.load %arg11[%c0_38, %c1] : memref<8x4xf32, #tpu.memory_space<vmem>>, vector<8x1xf32>
    %58 = vector.extract_strided_slice %45 {offsets = [1, 0], sizes = [1, 1], strides = [1, 1]} : vector<4x1xf32> to vector<1x1xf32>
    %59 = vector.broadcast %58 : vector<1x1xf32> to vector<8x1xf32>
    %60 = arith.mulf %57, %59 : vector<8x1xf32>
    %61 = vector.extract_strided_slice %3 {offsets = [1, 0], sizes = [1, 256], strides = [1, 1]} : vector<4x256xf32> to vector<1x256xf32>
    %62 = vector.broadcast %60 : vector<8x1xf32> to vector<8x256xf32>
    %63 = vector.broadcast %61 : vector<1x256xf32> to vector<8x256xf32>
    %64 = arith.mulf %62, %63 : vector<8x256xf32>
    %65 = arith.addf %56, %64 : vector<8x256xf32>
    %c0_39 = arith.constant 0 : index
    %c2 = arith.constant 2 : index
    %66 = vector.load %arg11[%c0_39, %c2] : memref<8x4xf32, #tpu.memory_space<vmem>>, vector<8x1xf32>
    %67 = vector.extract_strided_slice %45 {offsets = [2, 0], sizes = [1, 1], strides = [1, 1]} : vector<4x1xf32> to vector<1x1xf32>
    %68 = vector.broadcast %67 : vector<1x1xf32> to vector<8x1xf32>
    %69 = arith.mulf %66, %68 : vector<8x1xf32>
    %70 = vector.extract_strided_slice %3 {offsets = [2, 0], sizes = [1, 256], strides = [1, 1]} : vector<4x256xf32> to vector<1x256xf32>
    %71 = vector.broadcast %69 : vector<8x1xf32> to vector<8x256xf32>
    %72 = vector.broadcast %70 : vector<1x256xf32> to vector<8x256xf32>
    %73 = arith.mulf %71, %72 : vector<8x256xf32>
    %74 = arith.addf %65, %73 : vector<8x256xf32>
    %c0_40 = arith.constant 0 : index
    %c3 = arith.constant 3 : index
    %75 = vector.load %arg11[%c0_40, %c3] : memref<8x4xf32, #tpu.memory_space<vmem>>, vector<8x1xf32>
    %76 = vector.extract_strided_slice %45 {offsets = [3, 0], sizes = [1, 1], strides = [1, 1]} : vector<4x1xf32> to vector<1x1xf32>
    %77 = vector.broadcast %76 : vector<1x1xf32> to vector<8x1xf32>
    %78 = arith.mulf %75, %77 : vector<8x1xf32>
    %79 = vector.extract_strided_slice %3 {offsets = [3, 0], sizes = [1, 256], strides = [1, 1]} : vector<4x256xf32> to vector<1x256xf32>
    %80 = vector.broadcast %78 : vector<8x1xf32> to vector<8x256xf32>
    %81 = vector.broadcast %79 : vector<1x256xf32> to vector<8x256xf32>
    %82 = arith.mulf %80, %81 : vector<8x256xf32>
    %83 = arith.addf %74, %82 : vector<8x256xf32>
    %c0_41 = arith.constant 0 : index
    %c0_42 = arith.constant 0 : index
    %c0_43 = arith.constant 0 : index
    %84 = vector.load %arg12[%c0_41, %c0_42, %c0_43] : memref<1x8x256xf32, #tpu.memory_space<vmem>>, vector<1x8x256xf32>
    %85 = vector.shape_cast %84 : vector<1x8x256xf32> to vector<8x256xf32>
    %86 = vector.shape_cast %83 : vector<8x256xf32> to vector<1x8x256xf32>
    tpu.vector_store %arg12[%c0_41, %c0_42, %c0_43], %86 {strides = array<i32>} : memref<1x8x256xf32, #tpu.memory_space<vmem>>, vector<1x8x256xf32>,
    return
  }
  func.func @transform_0(%arg0: i32) -> (i32, i32, i32) {
    %c0_i32 = arith.constant 0 : i32
    %c0_i32_0 = arith.constant 0 : i32
    %c0_i32_1 = arith.constant 0 : i32
    return %arg0, %c0_i32, %c0_i32_0 : i32, i32, i32
  }
  func.func @transform_1(%arg0: i32) -> (i32, i32, i32) {
    %c0_i32 = arith.constant 0 : i32
    %c0_i32_0 = arith.constant 0 : i32
    %c0_i32_1 = arith.constant 0 : i32
    return %arg0, %c0_i32, %c0_i32_0 : i32, i32, i32
  }
  func.func @transform_2(%arg0: i32) -> (i32, i32) {
    %c0_i32 = arith.constant 0 : i32
    %c0_i32_0 = arith.constant 0 : i32
    %c0_i32_1 = arith.constant 0 : i32
    return %c0_i32, %c0_i32_0 : i32, i32
  }
  func.func @transform_3(%arg0: i32) -> (i32, i32) {
    %c0_i32 = arith.constant 0 : i32
    %c0_i32_0 = arith.constant 0 : i32
    %c0_i32_1 = arith.constant 0 : i32
    return %c0_i32, %c0_i32_0 : i32, i32
  }
  func.func @transform_4(%arg0: i32) -> (i32, i32) {
    %c0_i32 = arith.constant 0 : i32
    %c0_i32_0 = arith.constant 0 : i32
    %c0_i32_1 = arith.constant 0 : i32
    return %c0_i32, %c0_i32_0 : i32, i32
  }
  func.func @transform_5(%arg0: i32) -> (i32, i32) {
    %c0_i32 = arith.constant 0 : i32
    %c0_i32_0 = arith.constant 0 : i32
    %c0_i32_1 = arith.constant 0 : i32
    return %c0_i32, %c0_i32_0 : i32, i32
  }
  func.func @transform_6(%arg0: i32) -> (i32, i32) {
    %c0_i32 = arith.constant 0 : i32
    %c0_i32_0 = arith.constant 0 : i32
    %c0_i32_1 = arith.constant 0 : i32
    return %c0_i32, %c0_i32_0 : i32, i32
  }
  func.func @transform_7(%arg0: i32) -> (i32, i32) {
    %c0_i32 = arith.constant 0 : i32
    %c0_i32_0 = arith.constant 0 : i32
    %c0_i32_1 = arith.constant 0 : i32
    return %c0_i32, %c0_i32_0 : i32, i32
  }
  func.func @transform_8(%arg0: i32) -> (i32, i32) {
    %c0_i32 = arith.constant 0 : i32
    %c0_i32_0 = arith.constant 0 : i32
    %c0_i32_1 = arith.constant 0 : i32
    return %c0_i32, %c0_i32_0 : i32, i32
  }
  func.func @transform_9(%arg0: i32) -> (i32, i32) {
    %c0_i32 = arith.constant 0 : i32
    %c0_i32_0 = arith.constant 0 : i32
    %c0_i32_1 = arith.constant 0 : i32
    return %c0_i32, %c0_i32_0 : i32, i32
  }
  func.func @transform_10(%arg0: i32) -> (i32, i32) {
    %c0_i32 = arith.constant 0 : i32
    %c0_i32_0 = arith.constant 0 : i32
    %c0_i32_1 = arith.constant 0 : i32
    return %c0_i32, %c0_i32_0 : i32, i32
  }
  func.func @transform_11(%arg0: i32) -> (i32, i32, i32) {
    %c0_i32 = arith.constant 0 : i32
    %c0_i32_0 = arith.constant 0 : i32
    %c0_i32_1 = arith.constant 0 : i32
    return %arg0, %c0_i32, %c0_i32_0 : i32, i32, i32
  }
}

</mosaic_0001>

<llo_original>
// kernel: tpu_custom_call.1
$region0: #{tpu_custom_call.1}
  #allocation0 [shape = 'u32[]', space=smem, size = 0x4, offset = 0x4, fixed_abs, tag = 'smem constant byte address 0x4 - core index']
  #allocation1 [shape = 'u32[72,128]{1,0:T(1,128)}', space=vmem, size = 0x9000, scoped, tag = 'internal scratch']
  #allocation2 [shape = 'f32[1,1]{1,0:T(1,128)S(1)}', space=vmem, size = 0x200, scoped, tag = 'scoped memory for tpu_custom_call.1']
  %s0 = inlined_call_operand.hbm [shape: f32[2,8,256], index: 0, kind: input, shape index: {}]
  %s1 = inlined_call_operand.vmem [shape: f32[2,4,256], index: 1, kind: input, shape index: {}]
  %s2 = inlined_call_operand.vmem [shape: f32[2,8], index: 2, kind: input, shape index: {}]
  %s3 = inlined_call_operand.vmem [shape: f32[2,1], index: 3, kind: input, shape index: {}]
  %s4 = inlined_call_operand.vmem [shape: f32[8,2], index: 4, kind: input, shape index: {}]
  %s5 = inlined_call_operand.vmem [shape: f32[8,1], index: 5, kind: input, shape index: {}]
  %s6 = inlined_call_operand.vmem [shape: f32[1,4], index: 6, kind: input, shape index: {}]
  %s7 = inlined_call_operand.<no memory space> [shape: f32[1,1], index: 7, kind: input, shape index: {}]
  %s8 = inlined_call_operand.vmem [shape: f32[4,1], index: 8, kind: input, shape index: {}]
  %s9 = inlined_call_operand.vmem [shape: f32[4,1], index: 9, kind: input, shape index: {}]
  %s10 = inlined_call_operand.vmem [shape: f32[8,4], index: 10, kind: input, shape index: {}]
  %s11 = inlined_call_operand.hbm [shape: f32[2,8,256], index: 11, kind: output, shape index: {}]
  %s12 = sld [smem:[#allocation0]]
  $region81: #{tpu_custom_call.1} parent=0
    _
  %s14 = ssub.s32 1, %s12
  %s15 = scalar_select 0, %s14, %s12
  %v16 = vstv %s7
  %17 = vst [vmem:[#allocation2] sm:$0x1] %v16
  $region1: #{tpu_custom_call.1} parent=0
    #allocation3 [shape = 'u8[16384]{0}', space=vmem, size = 0x4000, scoped, tag = 'input window, operand 0']
    #allocation4 [shape = 's32[2]{0}', space=sflag, size = 0x8, scoped, tag = 'scoped memory for tpu_custom_call.1']
    #allocation5 [shape = 's32[2]{0}', space=sflag, size = 0x8, scoped, tag = 'scoped memory for tpu_custom_call.1']
    #allocation6 [shape = 'u8[16384]{0}', space=vmem, size = 0x4000, scoped, tag = 'output window, operand 0']
    %18 = vsyncpa [#allocation4], 0
    %s19 = scalar_lea.sflag [#allocation4], 1
    %20 = vsyncpa %s19, 0
    %21 = vsyncpa [#allocation5], 0
    %s22 = scalar_lea.sflag [#allocation5], 1
    %23 = vsyncpa %s22, 0
    loop: start=0, step=1, limit=4
    $region2: #{tpu_custom_call.1} parent=1 // loop_pre_header
      _
    $region3: #{tpu_custom_call.1} parent=1 // loop_header
      %s25 = sphi 0, %s29
      %p26 = scmp.ge.s32.totalorder %s25, 4
      %s35 = sphi 0, %s37
      %s38 = sphi 0, %s35
      %s39 = sphi 0, %s38
      %s55 = sphi 0, %s39
      %s61 = sphi 0, %s63
      %s64 = sphi 0, %s61
      %s65 = sphi 0, %s64
      %s81 = sphi 0, %s65
      %s85 = sphi 0, %s85
      %s87 = sphi 0, %s85
      %s88 = sphi 0, %s87
      %s102 = sphi 0, %s88
      %s106 = sphi 0, %s106
      %s108 = sphi 0, %s106
      %s109 = sphi 0, %s108
      %s123 = sphi 0, %s109
      %s127 = sphi 0, %s127
      %s129 = sphi 0, %s127
      %s130 = sphi 0, %s129
      %s144 = sphi 0, %s130
      %s148 = sphi 0, %s148
      %s150 = sphi 0, %s148
      %s151 = sphi 0, %s150
      %s165 = sphi 0, %s151
      %s169 = sphi 0, %s169
      %s171 = sphi 0, %s169
      %s172 = sphi 0, %s171
      %s186 = sphi 0, %s172
      %s190 = sphi 0, %s190
      %s192 = sphi 0, %s190
      %s193 = sphi 0, %s192
      %s207 = sphi 0, %s193
      %s211 = sphi 0, %s211
      %s213 = sphi 0, %s211
      %s214 = sphi 0, %s213
      %s228 = sphi 0, %s214
      %s232 = sphi 0, %s232
      %s234 = sphi 0, %s232
      %s235 = sphi 0, %s234
      %s249 = sphi 0, %s235
      %s253 = sphi 0, %s253
      %s255 = sphi 0, %s253
      %s256 = sphi 0, %s255
      %s270 = sphi 0, %s256
      %s276 = sphi 0, %s278
      %s279 = sphi 0, %s276
      %s280 = sphi 0, %s279
      %s296 = sphi 0, %s280
    $region4: #{tpu_custom_call.1} parent=1 // loop_header_branch
      %28 = sbr.rel (%p26) target = $region8
    $region5: #{tpu_custom_call.1} parent=1 // loop_body
      %s30 = ssub.s32 %s25, 1
      %s31 = ssub.s32 %s25, 2
      %s32 = sadd.s32 %s25, 1
      %s33 = ssub.s32 %s25, %s32
      %p34 = scmp.eq.s32.totalorder %s33, 0
      %s36 = sadd.s32 %s35, 1
      %s37 = scalar_select %p34, %s35, %s36
      %p40 = pneg %p34
      %p41 = scmp.eq.s32.totalorder %s25, 1
      %p42 = por %p40, %p41
      %p43 = scmp.ne.s32.totalorder %s35, %s38
      %p44 = scmp.eq.s32.totalorder %s25, 0
      %p45 = por %p43, %p44
      %p46 = scmp.ne.s32.totalorder %s35, %s38
      %p47 = scmp.eq.s32.totalorder %s30, 1
      %p48 = por %p46, %p47
      %p49 = scmp.ne.s32.totalorder %s38, %s39
      %p50 = scmp.eq.s32.totalorder %s30, 0
      %p51 = por %p49, %p50
      %p52 = scmp.ne.s32.totalorder %s38, %s39
      %p53 = scmp.eq.s32.totalorder %s31, 1
      %p54 = por %p52, %p53
      %p56 = scmp.ne.s32.totalorder %s39, %s55
      %p57 = scmp.eq.s32.totalorder %s31, 0
      %p58 = por %p56, %p57
      %s59 = ssub.s32 %s25, %s32
      %p60 = scmp.eq.s32.totalorder %s59, 0
      %s62 = sadd.s32 %s61, 1
      %s63 = scalar_select %p60, %s61, %s62
      %p66 = pneg %p60
      %p67 = scmp.eq.s32.totalorder %s25, 1
      %p68 = por %p66, %p67
      %p69 = scmp.ne.s32.totalorder %s61, %s64
      %p70 = scmp.eq.s32.totalorder %s25, 0
      %p71 = por %p69, %p70
      %p72 = scmp.ne.s32.totalorder %s61, %s64
      %p73 = scmp.eq.s32.totalorder %s30, 1
      %p74 = por %p72, %p73
      %p75 = scmp.ne.s32.totalorder %s64, %s65
      %p76 = scmp.eq.s32.totalorder %s30, 0
      %p77 = por %p75, %p76
      %p78 = scmp.ne.s32.totalorder %s64, %s65
      %p79 = scmp.eq.s32.totalorder %s31, 1
      %p80 = por %p78, %p79
      %p82 = scmp.ne.s32.totalorder %s65, %s81
      %p83 = scmp.eq.s32.totalorder %s31, 0
      %p84 = por %p82, %p83
      %s86 = sadd.s32 %s85, 1
      %p89 = scmp.eq.s32.totalorder %s25, 1
      %p90 = scmp.ne.s32.totalorder %s85, %s87
      %p91 = scmp.eq.s32.totalorder %s25, 0
      %p92 = por %p90, %p91
      %p93 = scmp.ne.s32.totalorder %s85, %s87
      %p94 = scmp.eq.s32.totalorder %s30, 1
      %p95 = por %p93, %p94
      %p96 = scmp.ne.s32.totalorder %s87, %s88
      %p97 = scmp.eq.s32.totalorder %s30, 0
      %p98 = por %p96, %p97
      %p99 = scmp.ne.s32.totalorder %s87, %s88
      %p100 = scmp.eq.s32.totalorder %s31, 1
      %p101 = por %p99, %p100
      %p103 = scmp.ne.s32.totalorder %s88, %s102
      %p104 = scmp.eq.s32.totalorder %s31, 0
      %p105 = por %p103, %p104
      %s107 = sadd.s32 %s106, 1
      %p110 = scmp.eq.s32.totalorder %s25, 1
      %p111 = scmp.ne.s32.totalorder %s106, %s108
      %p112 = scmp.eq.s32.totalorder %s25, 0
      %p113 = por %p111, %p112
      %p114 = scmp.ne.s32.totalorder %s106, %s108
      %p115 = scmp.eq.s32.totalorder %s30, 1
      %p116 = por %p114, %p115
      %p117 = scmp.ne.s32.totalorder %s108, %s109
      %p118 = scmp.eq.s32.totalorder %s30, 0
      %p119 = por %p117, %p118
      %p120 = scmp.ne.s32.totalorder %s108, %s109
      %p121 = scmp.eq.s32.totalorder %s31, 1
      %p122 = por %p120, %p121
      %p124 = scmp.ne.s32.totalorder %s109, %s123
      %p125 = scmp.eq.s32.totalorder %s31, 0
      %p126 = por %p124, %p125
      %s128 = sadd.s32 %s127, 1
      %p131 = scmp.eq.s32.totalorder %s25, 1
      %p132 = scmp.ne.s32.totalorder %s127, %s129
      %p133 = scmp.eq.s32.totalorder %s25, 0
      %p134 = por %p132, %p133
      %p135 = scmp.ne.s32.totalorder %s127, %s129
      %p136 = scmp.eq.s32.totalorder %s30, 1
      %p137 = por %p135, %p136
      %p138 = scmp.ne.s32.totalorder %s129, %s130
      %p139 = scmp.eq.s32.totalorder %s30, 0
      %p140 = por %p138, %p139
      %p141 = scmp.ne.s32.totalorder %s129, %s130
      %p142 = scmp.eq.s32.totalorder %s31, 1
      %p143 = por %p141, %p142
      %p145 = scmp.ne.s32.totalorder %s130, %s144
      %p146 = scmp.eq.s32.totalorder %s31, 0
      %p147 = por %p145, %p146
      %s149 = sadd.s32 %s148, 1
      %p152 = scmp.eq.s32.totalorder %s25, 1
      %p153 = scmp.ne.s32.totalorder %s148, %s150
      %p154 = scmp.eq.s32.totalorder %s25, 0
      %p155 = por %p153, %p154
      %p156 = scmp.ne.s32.totalorder %s148, %s150
      %p157 = scmp.eq.s32.totalorder %s30, 1
      %p158 = por %p156, %p157
      %p159 = scmp.ne.s32.totalorder %s150, %s151
      %p160 = scmp.eq.s32.totalorder %s30, 0
      %p161 = por %p159, %p160
      %p162 = scmp.ne.s32.totalorder %s150, %s151
      %p163 = scmp.eq.s32.totalorder %s31, 1
      %p164 = por %p162, %p163
      %p166 = scmp.ne.s32.totalorder %s151, %s165
      %p167 = scmp.eq.s32.totalorder %s31, 0
      %p168 = por %p166, %p167
      %s170 = sadd.s32 %s169, 1
      %p173 = scmp.eq.s32.totalorder %s25, 1
      %p174 = scmp.ne.s32.totalorder %s169, %s171
      %p175 = scmp.eq.s32.totalorder %s25, 0
      %p176 = por %p174, %p175
      %p177 = scmp.ne.s32.totalorder %s169, %s171
      %p178 = scmp.eq.s32.totalorder %s30, 1
      %p179 = por %p177, %p178
      %p180 = scmp.ne.s32.totalorder %s171, %s172
      %p181 = scmp.eq.s32.totalorder %s30, 0
      %p182 = por %p180, %p181
      %p183 = scmp.ne.s32.totalorder %s171, %s172
      %p184 = scmp.eq.s32.totalorder %s31, 1
      %p185 = por %p183, %p184
      %p187 = scmp.ne.s32.totalorder %s172, %s186
      %p188 = scmp.eq.s32.totalorder %s31, 0
      %p189 = por %p187, %p188
      %s191 = sadd.s32 %s190, 1
      %p194 = scmp.eq.s32.totalorder %s25, 1
      %p195 = scmp.ne.s32.totalorder %s190, %s192
      %p196 = scmp.eq.s32.totalorder %s25, 0
      %p197 = por %p195, %p196
      %p198 = scmp.ne.s32.totalorder %s190, %s192
      %p199 = scmp.eq.s32.totalorder %s30, 1
      %p200 = por %p198, %p199
      %p201 = scmp.ne.s32.totalorder %s192, %s193
      %p202 = scmp.eq.s32.totalorder %s30, 0
      %p203 = por %p201, %p202
      %p204 = scmp.ne.s32.totalorder %s192, %s193
      %p205 = scmp.eq.s32.totalorder %s31, 1
      %p206 = por %p204, %p205
      %p208 = scmp.ne.s32.totalorder %s193, %s207
      %p209 = scmp.eq.s32.totalorder %s31, 0
      %p210 = por %p208, %p209
      %s212 = sadd.s32 %s211, 1
      %p215 = scmp.eq.s32.totalorder %s25, 1
      %p216 = scmp.ne.s32.totalorder %s211, %s213
      %p217 = scmp.eq.s32.totalorder %s25, 0
      %p218 = por %p216, %p217
      %p219 = scmp.ne.s32.totalorder %s211, %s213
      %p220 = scmp.eq.s32.totalorder %s30, 1
      %p221 = por %p219, %p220
      %p222 = scmp.ne.s32.totalorder %s213, %s214
      %p223 = scmp.eq.s32.totalorder %s30, 0
      %p224 = por %p222, %p223
      %p225 = scmp.ne.s32.totalorder %s213, %s214
      %p226 = scmp.eq.s32.totalorder %s31, 1
      %p227 = por %p225, %p226
      %p229 = scmp.ne.s32.totalorder %s214, %s228
      %p230 = scmp.eq.s32.totalorder %s31, 0
      %p231 = por %p229, %p230
      %s233 = sadd.s32 %s232, 1
      %p236 = scmp.eq.s32.totalorder %s25, 1
      %p237 = scmp.ne.s32.totalorder %s232, %s234
      %p238 = scmp.eq.s32.totalorder %s25, 0
      %p239 = por %p237, %p238
      %p240 = scmp.ne.s32.totalorder %s232, %s234
      %p241 = scmp.eq.s32.totalorder %s30, 1
      %p242 = por %p240, %p241
      %p243 = scmp.ne.s32.totalorder %s234, %s235
      %p244 = scmp.eq.s32.totalorder %s30, 0
      %p245 = por %p243, %p244
      %p246 = scmp.ne.s32.totalorder %s234, %s235
      %p247 = scmp.eq.s32.totalorder %s31, 1
      %p248 = por %p246, %p247
      %p250 = scmp.ne.s32.totalorder %s235, %s249
      %p251 = scmp.eq.s32.totalorder %s31, 0
      %p252 = por %p250, %p251
      %s254 = sadd.s32 %s253, 1
      %p257 = scmp.eq.s32.totalorder %s25, 1
      %p258 = scmp.ne.s32.totalorder %s253, %s255
      %p259 = scmp.eq.s32.totalorder %s25, 0
      %p260 = por %p258, %p259
      %p261 = scmp.ne.s32.totalorder %s253, %s255
      %p262 = scmp.eq.s32.totalorder %s30, 1
      %p263 = por %p261, %p262
      %p264 = scmp.ne.s32.totalorder %s255, %s256
      %p265 = scmp.eq.s32.totalorder %s30, 0
      %p266 = por %p264, %p265
      %p267 = scmp.ne.s32.totalorder %s255, %s256
      %p268 = scmp.eq.s32.totalorder %s31, 1
      %p269 = por %p267, %p268
      %p271 = scmp.ne.s32.totalorder %s256, %s270
      %p272 = scmp.eq.s32.totalorder %s31, 0
      %p273 = por %p271, %p272
      %s274 = ssub.s32 %s25, %s32
      %p275 = scmp.eq.s32.totalorder %s274, 0
      %s277 = sadd.s32 %s276, 1
      %s278 = scalar_select %p275, %s276, %s277
      %p281 = pneg %p275
      %p282 = scmp.eq.s32.totalorder %s25, 1
      %p283 = por %p281, %p282
      %p284 = scmp.ne.s32.totalorder %s276, %s279
      %p285 = scmp.eq.s32.totalorder %s25, 0
      %p286 = por %p284, %p285
      %p287 = scmp.ne.s32.totalorder %s276, %s279
      %p288 = scmp.eq.s32.totalorder %s30, 1
      %p289 = por %p287, %p288
      %p290 = scmp.ne.s32.totalorder %s279, %s280
      %p291 = scmp.eq.s32.totalorder %s30, 0
      %p292 = por %p290, %p291
      %p293 = scmp.ne.s32.totalorder %s279, %s280
      %p294 = scmp.eq.s32.totalorder %s31, 1
      %p295 = por %p293, %p294
      %p297 = scmp.ne.s32.totalorder %s280, %s296
      %p298 = scmp.eq.s32.totalorder %s31, 0
      %p299 = por %p297, %p298
      %p300 = scmp.le.s32.totalorder 1, %s25
      %p301 = scmp.lt.s32.totalorder %s25, 3
      %p302 = pnand %p300, %p301
      %p303 = pneg %p302
      // Predicated region
      $region9: #{tpu_custom_call.1} parent=5 // pred_check
        _
      $region10: #{tpu_custom_call.1} parent=5 // pred_check_branch
        %305 = sbr.rel (%p302) target = $region12
      $region11: #{tpu_custom_call.1} parent=5 // pred_region
        %s306 = ssub.s32 %s25, 1
        // Predicated region
        $region13: #{tpu_custom_call.1} parent=11 // pred_check
          %p307 = pneg %p98
        $region14: #{tpu_custom_call.1} parent=11 // pred_check_branch
          %309 = sbr.rel (%p307) target = $region16
        $region15: #{tpu_custom_call.1} parent=11 // pred_region
          _
        $region16: #{tpu_custom_call.1} parent=11 // pred_fallthru
          _
        // Predicated region
        $region17: #{tpu_custom_call.1} parent=11 // pred_check
          %p310 = pneg %p119
        $region18: #{tpu_custom_call.1} parent=11 // pred_check_branch
          %312 = sbr.rel (%p310) target = $region20
        $region19: #{tpu_custom_call.1} parent=11 // pred_region
          _
        $region20: #{tpu_custom_call.1} parent=11 // pred_fallthru
          _
        // Predicated region
        $region21: #{tpu_custom_call.1} parent=11 // pred_check
          %p313 = pneg %p140
        $region22: #{tpu_custom_call.1} parent=11 // pred_check_branch
          %315 = sbr.rel (%p313) target = $region24
        $region23: #{tpu_custom_call.1} parent=11 // pred_region
          _
        $region24: #{tpu_custom_call.1} parent=11 // pred_fallthru
          _
        // Predicated region
        $region25: #{tpu_custom_call.1} parent=11 // pred_check
          %p316 = pneg %p161
        $region26: #{tpu_custom_call.1} parent=11 // pred_check_branch
          %318 = sbr.rel (%p316) target = $region28
        $region27: #{tpu_custom_call.1} parent=11 // pred_region
          _
        $region28: #{tpu_custom_call.1} parent=11 // pred_fallthru
          _
        // Predicated region
        $region29: #{tpu_custom_call.1} parent=11 // pred_check
          %p319 = pneg %p182
        $region30: #{tpu_custom_call.1} parent=11 // pred_check_branch
          %321 = sbr.rel (%p319) target = $region32
        $region31: #{tpu_custom_call.1} parent=11 // pred_region
          _
        $region32: #{tpu_custom_call.1} parent=11 // pred_fallthru
          _
        // Predicated region
        $region33: #{tpu_custom_call.1} parent=11 // pred_check
          %p322 = pneg %p203
        $region34: #{tpu_custom_call.1} parent=11 // pred_check_branch
          %324 = sbr.rel (%p322) target = $region36
        $region35: #{tpu_custom_call.1} parent=11 // pred_region
          _
        $region36: #{tpu_custom_call.1} parent=11 // pred_fallthru
          _
        // Predicated region
        $region37: #{tpu_custom_call.1} parent=11 // pred_check
          %p325 = pneg %p224
        $region38: #{tpu_custom_call.1} parent=11 // pred_check_branch
          %327 = sbr.rel (%p325) target = $region40
        $region39: #{tpu_custom_call.1} parent=11 // pred_region
          _
        $region40: #{tpu_custom_call.1} parent=11 // pred_fallthru
          _
        // Predicated region
        $region41: #{tpu_custom_call.1} parent=11 // pred_check
          %p328 = pneg %p245
        $region42: #{tpu_custom_call.1} parent=11 // pred_check_branch
          %330 = sbr.rel (%p328) target = $region44
        $region43: #{tpu_custom_call.1} parent=11 // pred_region
          _
        $region44: #{tpu_custom_call.1} parent=11 // pred_fallthru
          _
        // Predicated region
        $region45: #{tpu_custom_call.1} parent=11 // pred_check
          %p331 = pneg %p266
        $region46: #{tpu_custom_call.1} parent=11 // pred_check_branch
          %333 = sbr.rel (%p331) target = $region48
        $region47: #{tpu_custom_call.1} parent=11 // pred_region
          _
        $region48: #{tpu_custom_call.1} parent=11 // pred_fallthru
          _
      $region12: #{tpu_custom_call.1} parent=5 // pred_fallthru
        _
      %p334 = scmp.lt.s32.totalorder %s25, 2
      // Predicated region
      $region49: #{tpu_custom_call.1} parent=5 // pred_check
        %p335 = pneg %p334
      $region50: #{tpu_custom_call.1} parent=5 // pred_check_branch
        %337 = sbr.rel (%p335) target = $region52
      $region51: #{tpu_custom_call.1} parent=5 // pred_region
        // Predicated region
        $region53: #{tpu_custom_call.1} parent=51 // pred_check
          %p338 = pneg %p45
        $region54: #{tpu_custom_call.1} parent=51 // pred_check_branch
          %340 = sbr.rel (%p338) target = $region56
        $region55: #{tpu_custom_call.1} parent=51 // pred_region
          %s341 = sand.u32 %s35, 1
          %s342 = scalar_lea.sflag [#allocation4], %s341
          %s343 = sand.u32 %s35, 1
          %s344 = smul.addr %s343, 16
          %s345 = scalar_lea.vmem [#allocation3], %s344
          %347 = vsyncadd %s342, 0
          %s348 = smul.addr %s25, 2
          %s349 = smul.addr %s348, 8
          %s350 = scalar_lea.hbm %s0, %s349
          %s352 = sshll.u32 %s350, 4
          %s353 = int_to_ptr.hbm [resolvable:$true] %s352
          %s354 = sshll.u32 %s345, 4
          %s355 = int_to_ptr.vmem [resolvable:$true] %s354
          %357 = dma.hbm_to_vmem [thread:$0]  %s353, 256, %s355, %s342
        $region56: #{tpu_custom_call.1} parent=51 // pred_fallthru
          _
        // Predicated region
        $region57: #{tpu_custom_call.1} parent=51 // pred_check
          %p358 = pneg %p71
        $region58: #{tpu_custom_call.1} parent=51 // pred_check_branch
          %360 = sbr.rel (%p358) target = $region60
        $region59: #{tpu_custom_call.1} parent=51 // pred_region
          %p361 = scmp.lt.s32.totalorder %s25, 1
          %s362 = scalar_select %p361, %s25, 1
          %s363 = smul.addr %s362, 2
          %s364 = smul.addr %s363, 4
          %s365 = scalar_lea.vmem %s1, %s364
        $region60: #{tpu_custom_call.1} parent=51 // pred_fallthru
          _
      $region52: #{tpu_custom_call.1} parent=5 // pred_fallthru
        _
      %p366 = scmp.le.s32.totalorder 1, %s25
      %p367 = scmp.lt.s32.totalorder %s25, 3
      %p368 = pnand %p366, %p367
      %p369 = pneg %p368
      // Predicated region
      $region61: #{tpu_custom_call.1} parent=5 // pred_check
        _
      $region62: #{tpu_custom_call.1} parent=5 // pred_check_branch
        %371 = sbr.rel (%p368) target = $region64
      $region63: #{tpu_custom_call.1} parent=5 // pred_region
        %s372 = ssub.s32 %s25, 1
        %s373 = sand.u32 %s38, 1
        %s374 = scalar_lea.sflag [#allocation4], %s373
        %s375 = sand.u32 %s38, 1
        %s376 = smul.addr %s375, 16
        %s377 = scalar_lea.vmem [#allocation3], %s376
        // Predicated region
        $region65: #{tpu_custom_call.1} parent=63 // pred_check
          %p378 = pneg %p51
        $region66: #{tpu_custom_call.1} parent=63 // pred_check_branch
          %380 = sbr.rel (%p378) target = $region68
        $region67: #{tpu_custom_call.1} parent=63 // pred_region
          %382 = dma.done %s374, 256
        $region68: #{tpu_custom_call.1} parent=63 // pred_fallthru
          _
        %s383 = sand.u32 %s38, 1
        %s384 = scalar_lea.sflag [#allocation4], %s383
        %s385 = sand.u32 %s38, 1
        %s386 = smul.addr %s385, 16
        %s387 = scalar_lea.vmem [#allocation3], %s386
        %p388 = pneg %p51
        %p389 = pneg %p48
        %p390 = scmp.lt.s32.totalorder %s30, 1
        %s391 = scalar_select %p390, %s30, 1
        %s392 = smul.addr %s391, 2
        %s393 = smul.addr %s392, 4
        %s394 = scalar_lea.vmem %s1, %s393
        %p395 = pneg %p77
        %p396 = pneg %p74
        %p397 = pneg %p98
        %p398 = pneg %p95
        %p399 = pneg %p119
        %p400 = pneg %p116
        %p401 = pneg %p140
        %p402 = pneg %p137
        %p403 = pneg %p161
        %p404 = pneg %p158
        %p405 = pneg %p182
        %p406 = pneg %p179
        %p407 = pneg %p203
        %p408 = pneg %p200
        %p409 = pneg %p224
        %p410 = pneg %p221
        %p411 = pneg %p245
        %p412 = pneg %p242
        %p413 = pneg %p266
        %p414 = pneg %p263
        %p415 = pneg %p292
        %p416 = pneg %p289
        %s417 = sand.u32 %s279, 1
        %s418 = scalar_lea.sflag [#allocation5], %s417
        %s419 = sand.u32 %s279, 1
        %s420 = smul.addr %s419, 16
        %s421 = scalar_lea.vmem [#allocation6], %s420
        %p422 = scmp.lt.s32.totalorder %s30, 1
        %s423 = scalar_select %p422, %s30, 1
        %s424 = smul.addr %s423, 2
        %s425 = smul.addr %s424, 4
        %s426 = scalar_lea.vmem %s1, %s425
        %v427 = vld [vmem:[%s377] sm:$0xff]
        %v428 = vld [vmem:[%s377 + $0x8] sm:$0xff]
        %v429 = vld [vmem:[%s426] sm:$0xff]
        %v430 = vld [vmem:[%s2] sm:$0x3]
        %v431 = vld [vmem:[%s3] sm:$0x3]
        %v432 = vld [vmem:[%s4] sm:$0xff]
        %v433 = vld [vmem:[%s5] sm:$0xff]
        %v434 = vadd.f32 %v427, %v428
        %435 = vadd.xlane.f32.xlu0 %v434
        %v436 = vpop.xlane.xlu0 %435
        %v437 = vmul.f32 %v436, 0.00390625
        %vm438 = vcmask 64512
        %v440 = vsel %vm438, %v430, 0
        %442 = vmatpush.msra.mxu0 0.0
        %443 = vmatpush.msra.mxu0 0.0
        %444 = vmatpush.msra.mxu0 0.0
        %445 = vmatpush.msra.mxu0 0.0
        %446 = vmatpush.msra.mxu0 0.0
        %447 = vmatpush.msra.mxu0 0.0
        %448 = vmatpush.msra.mxu0 0.0
        %449 = vmatpush.msra.mxu0 0.0
        %450 = vmatpush.msra.mxu0 0.0
        %451 = vmatpush.msra.mxu0 0.0
        %452 = vmatpush.msra.mxu0 0.0
        %453 = vmatpush.msra.mxu0 0.0
        %454 = vmatpush.msra.mxu0 0.0
        %455 = vmatpush.msra.mxu0 0.0
        %456 = vmatpush.msra.mxu0 0.0
        %457 = vmatpush.msra.mxu0 %v437
        %458 = vmatmul.f32.gmra.mxu0 %v440
        %v459 = vpop.f32.mrf.mxu0
        %v460 = vadd.f32 %v431, %v459
        %461 = vdwg.mxu0
        %v462 = vmax.f32 %v460, 0.0
        %vm463 = vcmask 15360
        %v465 = vsel %vm463, %v432, 0
        %vm467 = vcmask 1041408
        %v469 = vsel %vm467, %v462, 0
        %471 = vmatpush.msra.mxu0 0.0
        %472 = vmatpush.msra.mxu0 0.0
        %473 = vmatpush.msra.mxu0 0.0
        %474 = vmatpush.msra.mxu0 0.0
        %475 = vmatpush.msra.mxu0 0.0
        %476 = vmatpush.msra.mxu0 0.0
        %477 = vmatpush.msra.mxu0 0.0
        %478 = vmatpush.msra.mxu0 0.0
        %479 = vmatpush.msra.mxu0 0.0
        %480 = vmatpush.msra.mxu0 0.0
        %481 = vmatpush.msra.mxu0 0.0
        %482 = vmatpush.msra.mxu0 0.0
        %483 = vmatpush.msra.mxu0 0.0
        %484 = vmatpush.msra.mxu0 0.0
        %485 = vmatpush.msra.mxu0 0.0
        %486 = vmatpush.msra.mxu0 %v469
        %487 = vmatmul.f32.gmra.mxu0 %v465
        %v488 = vpop.f32.mrf.mxu0
        %v489 = vadd.f32 %v433, %v488
        %490 = vdwg.mxu0
        %v491 = vsub.f32 0.0, %v489
        %v492 = vmul.f32 %v491, 1.442695
        %v493 = vpow.pop %v492
        %v494 = vadd.f32 %v493, 1.0
        %v495 = vrcp.pop %v494
        %v496 = vmul.f32 %v494, %v495
        %v497 = vsub.f32 1.0, %v496
        %v498 = vmul.f32 %v495, %v497
        %v499 = vadd.f32 %v495, %v498
        %vm500 = vweird.f32 %v494
        %vm501 = vweird.f32 %v495
        %vm502 = vmor %vm500, %vm501
        %v503 = vsel %vm502, %v495, %v499
        %v504 = vand.u32 2147483647, %v494
        %vm505 = vcmp.eq.f32.partialorder %v504, 8.507059e+37
        %v506 = vand.u32 %v494, 2147483648
        %v507 = vor.u32 1.1754944e-38, %v506
        %v508 = vsel %vm505, %v507, %v503
        %v509 = vmul.f32 1.0, %v508
        %v510 = vld [vmem:[%s6] sm:$0x1]
        %v511 = vld [vmem:[#allocation2] sm:$0x1]
        %v512 = vld [vmem:[%s8] sm:$0xf]
        %v513 = vld [vmem:[%s9] sm:$0xf]
        %515 = vst [vmem:[#allocation1] ss:$2 sm:$0xff] %v429
        %v516 = vld.sshfl [vmem:[#allocation1] sm:$0xff pattern:$0x75316420]
        %v517 = vld.sshfl [vmem:[#allocation1 + $0x8] sm:$0xff pattern:$0x75316420]
        %vm520 = vcmask 1043456
        %v521 = vsel %vm520, %v516, 0.0
        %v522 = vsel %vm520, %v517, 0.0
        %v523 = vadd.f32 %v521, %v522
        %524 = vadd.xlane.f32.xlu0 %v523
        %v525 = vpop.xlane.xlu0 %524
        %v526 = vmul.f32 %v525, 0.00390625
        %vm527 = vcmask 31744
        %v529 = vsel %vm527, %v510, 0
        %v532 = vsel %vm520, %v526, 0
        %534 = vmatpush.msra.mxu0 0.0
        %535 = vmatpush.msra.mxu0 0.0
        %536 = vmatpush.msra.mxu0 0.0
        %537 = vmatpush.msra.mxu0 0.0
        %538 = vmatpush.msra.mxu0 0.0
        %539 = vmatpush.msra.mxu0 0.0
        %540 = vmatpush.msra.mxu0 0.0
        %541 = vmatpush.msra.mxu0 0.0
        %542 = vmatpush.msra.mxu0 0.0
        %543 = vmatpush.msra.mxu0 0.0
        %544 = vmatpush.msra.mxu0 0.0
        %545 = vmatpush.msra.mxu0 0.0
        %546 = vmatpush.msra.mxu0 0.0
        %547 = vmatpush.msra.mxu0 0.0
        %548 = vmatpush.msra.mxu0 0.0
        %549 = vmatpush.msra.mxu0 %v532
        %550 = vmatmul.f32.gmra.mxu0 %v529
        %v551 = vpop.f32.mrf.mxu0
        %v552 = vadd.f32 %v511, %v551
        %553 = vdwg.mxu0
        %v554 = vmax.f32 %v552, 0.0
        %vm555 = vcmask 7168
        %v557 = vsel %vm555, %v512, 0
        %vm559 = vcmask 1040384
        %v561 = vsel %vm559, %v554, 0
        %563 = vmatpush.msra.mxu0 0.0
        %564 = vmatpush.msra.mxu0 0.0
        %565 = vmatpush.msra.mxu0 0.0
        %566 = vmatpush.msra.mxu0 0.0
        %567 = vmatpush.msra.mxu0 0.0
        %568 = vmatpush.msra.mxu0 0.0
        %569 = vmatpush.msra.mxu0 0.0
        %570 = vmatpush.msra.mxu0 0.0
        %571 = vmatpush.msra.mxu0 0.0
        %572 = vmatpush.msra.mxu0 0.0
        %573 = vmatpush.msra.mxu0 0.0
        %574 = vmatpush.msra.mxu0 0.0
        %575 = vmatpush.msra.mxu0 0.0
        %576 = vmatpush.msra.mxu0 0.0
        %577 = vmatpush.msra.mxu0 0.0
        %578 = vmatpush.msra.mxu0 %v561
        %579 = vmatmul.f32.gmra.mxu0 %v557
        %v580 = vpop.f32.mrf.mxu0
        %v581 = vadd.f32 %v513, %v580
        %582 = vdwg.mxu0
        %v583 = vsub.f32 0.0, %v581
        %v584 = vmul.f32 %v583, 1.442695
        %v585 = vpow.pop %v584
        %v586 = vadd.f32 %v585, 1.0
        %v587 = vrcp.pop %v586
        %v588 = vmul.f32 %v586, %v587
        %v589 = vsub.f32 1.0, %v588
        %v590 = vmul.f32 %v587, %v589
        %v591 = vadd.f32 %v587, %v590
        %vm592 = vweird.f32 %v586
        %vm593 = vweird.f32 %v587
        %vm594 = vmor %vm592, %vm593
        %v595 = vsel %vm594, %v587, %v591
        %v596 = vand.u32 2147483647, %v586
        %vm597 = vcmp.eq.f32.partialorder %v596, 8.507059e+37
        %v598 = vand.u32 %v586, 2147483648
        %v599 = vor.u32 1.1754944e-38, %v598
        %v600 = vsel %vm597, %v599, %v595
        %v601 = vmul.f32 1.0, %v600
        %603 = vset.pattern.permute.xlu0 0
        %604 = vperm.xlu0 %603, %v509
        %v605 = vpop.permute.xlu0 %604
        %v607 = vmul.f32 %v427, %v605
        %v608 = vmul.f32 %v428, %v605
        %v609 = vld [vmem:[%s10] sm:$0xff]
        %v610 = vperm.slane %v601, 0
        %v611 = vmul.f32 %v609, %v610
        %613 = vset.pattern.permute.xlu0 0
        %614 = vperm.xlu0 %613, %v611
        %v615 = vpop.permute.xlu0 %614
        %v617 = vperm.slane %v429, 0
        %v618 = vperm.slane %v429, 4
        %v621 = vperm.slane %v617, 0
        %v622 = vperm.slane %v618, 0
        %v623 = vmul.f32 %v615, %v621
        %v624 = vmul.f32 %v615, %v622
        %v625 = vadd.f32 %v607, %v623
        %v626 = vadd.f32 %v608, %v624
        %v627 = vperm.slane %v601, 1
        %629 = vrot.lane.b32.xlu0 %v627, 1
        %v630 = vpop.permute.xlu0 %629
        %v632 = vmul.f32 %v609, %v630
        %634 = vset.pattern.permute.xlu0 1
        %635 = vperm.xlu0 %634, %v632
        %v636 = vpop.permute.xlu0 %635
        %v638 = vperm.slane %v429, 1
        %v639 = vperm.slane %v429, 5
        %v642 = vperm.slane %v638, 1
        %v643 = vperm.slane %v639, 1
        %v644 = vmul.f32 %v636, %v642
        %v645 = vmul.f32 %v636, %v643
        %v646 = vadd.f32 %v625, %v644
        %v647 = vadd.f32 %v626, %v645
        %v648 = vperm.slane %v601, 2
        %650 = vrot.lane.b32.xlu0 %v648, 2
        %v651 = vpop.permute.xlu0 %650
        %v653 = vmul.f32 %v609, %v651
        %655 = vset.pattern.permute.xlu0 2
        %656 = vperm.xlu0 %655, %v653
        %v657 = vpop.permute.xlu0 %656
        %v659 = vperm.slane %v429, 2
        %v660 = vperm.slane %v429, 6
        %v663 = vperm.slane %v659, 2
        %v664 = vperm.slane %v660, 2
        %v665 = vmul.f32 %v657, %v663
        %v666 = vmul.f32 %v657, %v664
        %v667 = vadd.f32 %v646, %v665
        %v668 = vadd.f32 %v647, %v666
        %v669 = vperm.slane %v601, 3
        %671 = vrot.lane.b32.xlu0 %v669, 3
        %v672 = vpop.permute.xlu0 %671
        %v674 = vmul.f32 %v609, %v672
        %676 = vset.pattern.permute.xlu0 3
        %677 = vperm.xlu0 %676, %v674
        %v678 = vpop.permute.xlu0 %677
        %v680 = vperm.slane %v429, 3
        %v681 = vperm.slane %v429, 7
        %v684 = vperm.slane %v680, 3
        %v685 = vperm.slane %v681, 3
        %v686 = vmul.f32 %v678, %v684
        %v687 = vmul.f32 %v678, %v685
        %v688 = vadd.f32 %v667, %v686
        %v689 = vadd.f32 %v668, %v687
        %690 = vst [vmem:[%s421] sm:$0xff] %v688
        %691 = vst [vmem:[%s421 + $0x8] sm:$0xff] %v689
        %s692 = sand.u32 %s279, 1
        %s693 = scalar_lea.sflag [#allocation5], %s692
        %s694 = sand.u32 %s279, 1
        %s695 = smul.addr %s694, 16
        %s696 = scalar_lea.vmem [#allocation6], %s695
        // Predicated region
        $region69: #{tpu_custom_call.1} parent=63 // pred_check
          %p697 = pneg %p289
        $region70: #{tpu_custom_call.1} parent=63 // pred_check_branch
          %699 = sbr.rel (%p697) target = $region72
        $region71: #{tpu_custom_call.1} parent=63 // pred_region
          %701 = vsyncadd %s693, 0
          %s702 = smul.addr %s30, 2
          %s703 = smul.addr %s702, 8
          %s704 = scalar_lea.hbm %s11, %s703
          %s706 = sshll.u32 %s696, 4
          %s707 = int_to_ptr.vmem [resolvable:$true] %s706
          %s708 = sshll.u32 %s704, 4
          %s709 = int_to_ptr.hbm [resolvable:$true] %s708
          %711 = dma.vmem_to_hbm [thread:$0]  %s707, 256, %s709, %s693
        $region72: #{tpu_custom_call.1} parent=63 // pred_fallthru
          _
      $region64: #{tpu_custom_call.1} parent=5 // pred_fallthru
        _
      %p712 = scmp.le.s32.totalorder 2, %s25
      // Predicated region
      $region73: #{tpu_custom_call.1} parent=5 // pred_check
        %p713 = pneg %p712
      $region74: #{tpu_custom_call.1} parent=5 // pred_check_branch
        %715 = sbr.rel (%p713) target = $region76
      $region75: #{tpu_custom_call.1} parent=5 // pred_region
        %s716 = ssub.s32 %s25, 2
        // Predicated region
        $region77: #{tpu_custom_call.1} parent=75 // pred_check
          %p717 = pneg %p295
        $region78: #{tpu_custom_call.1} parent=75 // pred_check_branch
          %719 = sbr.rel (%p717) target = $region80
        $region79: #{tpu_custom_call.1} parent=75 // pred_region
          %s720 = sand.u32 %s280, 1
          %s721 = scalar_lea.sflag [#allocation5], %s720
          %s722 = sand.u32 %s280, 1
          %s723 = smul.addr %s722, 16
          %s724 = scalar_lea.vmem [#allocation6], %s723
          %726 = dma.done %s721, 256
        $region80: #{tpu_custom_call.1} parent=75 // pred_fallthru
          _
      $region76: #{tpu_custom_call.1} parent=5 // pred_fallthru
        _
    $region6: #{tpu_custom_call.1} parent=1 // loop_footer
      %s29 = sadd.s32 1, %s25
    $region7: #{tpu_custom_call.1} parent=1 // loop_footer_branch
      %24 = sbr.rel target = $region3
    $region8: #{tpu_custom_call.1} parent=1 // loop_exit
      _
    %727 = vsyncpa [#allocation4], 1
    %s728 = scalar_lea.sflag [#allocation4], 1
    %729 = vsyncpa %s728, 1
    %730 = vsyncpa [#allocation5], 1
    %s731 = scalar_lea.sflag [#allocation5], 1
    %732 = vsyncpa %s731, 1

</llo_original>
